<compile_context>
chip_gen: v7x
topology: tpu7x:2x2x1
jax: 0.10.0
libtpu: 0.0.40
codegen_flags: <defaults>
</compile_context>

<pallas_src>
import math

import jax
import jax.numpy as jnp
from jax.experimental import pallas as pl
from jax.experimental.pallas import tpu as pltpu


def _copy_kernel(x_ref, o_ref):
    # Pure data movement; the dim-combine is metadata handled in the wrapper.
    o_ref[...] = x_ref[...]


def _alias_noop_kernel(x_ref, o_ref):
    # Output aliases input: the bytes are already correct; just pin a dependency so
    # the aliased output materializes. No DMA, no compute.
    del x_ref
    pltpu.touch(o_ref)


_LANE_CHOICES = (2048, 1024, 512, 256, 128)


def _sublane_align(dtype):
    # Native sublane tile: 8 rows for 32-bit, 16 for bf16/f16, 32 for int8/fp8.
    return max(8, 32 // jnp.dtype(dtype).itemsize)


def _pick_lane_width(total, align):
    # Widest lane width (multiple of 128) dividing the flat size with full sublane
    # occupancy (rows >= native sublane tile). Returns None for awkward totals
    # (caller pads to a lane-dense slab instead of taking masked stores).
    for lanes in _LANE_CHOICES:
        if total % lanes == 0 and total // lanes >= align:
            return lanes
    for lanes in _LANE_CHOICES:
        if total % lanes == 0:
            return lanes
    return None


def _pick_block_rows(rows, row_bytes, align, budget_bytes=8 << 20):
    # Largest align-multiple row block that fits ~8 MiB (big enough to amortize the
    # ~0.35 us per-grid-step overhead, small enough that 2 in + 2 out double-buffered
    # tiles fit v7x's 64 MiB VMEM), while guaranteeing >= 2 grid steps so both v7x
    # TensorCores stream and the in/out DMAs overlap.
    if rows <= 2 * align:
        return rows  # tiny tensor: single full-extent tile (legal: equals array dim)
    cap = max(align, (budget_bytes // max(row_bytes, 1)) // align * align)
    half = max(align, (rows // 2) // align * align)
    return min(cap, half)


def _vmem_limit_bytes():
    # Generation-aware: leave headroom under the smallest physical VMEM (v7x: 64 MiB).
    try:
        cap = int(pltpu.get_tpu_info().vmem_capacity_bytes)
    except Exception:
        cap = 64 << 20
    return min(40 << 20, max(16 << 20, (cap * 3) // 4))


def combine_dim(x, dim=1, num_dims=2, *, alias_input=False):
    """CombineDim.forward: merge `num_dims` consecutive axes starting at `dim`."""
    sh = list(x.shape)
    nd = len(sh)
    if dim < 0:
        dim = nd + dim
    assert 0 <= dim and dim + num_dims <= nd and num_dims >= 1

    merged = math.prod(sh[dim:dim + num_dims])
    out_shape = tuple(sh[:dim]) + (merged,) + tuple(sh[dim + num_dims:])

    total = math.prod(sh)
    if total == 0:
        return jnp.reshape(x, out_shape)

    if alias_input:
        # True no-op when the caller donates x: zero bytes of HBM traffic.
        y = pl.pallas_call(
            _alias_noop_kernel,
            out_shape=jax.ShapeDtypeStruct(x.shape, x.dtype),
            in_specs=[pl.BlockSpec(memory_space=pl.ANY)],
            out_specs=pl.BlockSpec(memory_space=pl.ANY),
            input_output_aliases={0: 0},
            compiler_params=pltpu.CompilerParams(has_side_effects=True),
        )(x)
        return jnp.reshape(y, out_shape)

    dtype = x.dtype
    align = _sublane_align(dtype)
    lanes = _pick_lane_width(total, align)

    if lanes is None:
        # Awkward flat size (not a multiple of 128): pad to a lane-dense slab so all
        # stores are full-width unmasked vst, copy, then slice the tail off.
        lanes = 128
        chunk = lanes * align
        padded = ((total + chunk - 1) // chunk) * chunk
        flat = jnp.pad(jnp.reshape(x, (total,)), (0, padded - total))
        eff_total = padded
    else:
        flat = jnp.reshape(x, (total,))  # free metadata reshape (contiguous)
        eff_total = total

    rows = eff_total // lanes
    x2 = jnp.reshape(flat, (rows, lanes))

    row_bytes = lanes * jnp.dtype(dtype).itemsize
    block_rows = _pick_block_rows(rows, row_bytes, align)
    grid = (pl.cdiv(rows, block_rows),)  # ragged last block handled by Pallas

    y2 = pl.pallas_call(
        _copy_kernel,
        out_shape=jax.ShapeDtypeStruct((rows, lanes), dtype),
        grid=grid,
        in_specs=[pl.BlockSpec((block_rows, lanes), lambda i: (i, 0))],
        out_specs=pl.BlockSpec((block_rows, lanes), lambda i: (i, 0)),
        compiler_params=pltpu.CompilerParams(
            dimension_semantics=("parallel",),
            vmem_limit_bytes=_vmem_limit_bytes(),
        ),
    )(x2)

    flat_out = jnp.reshape(y2, (eff_total,))
    if eff_total != total:
        flat_out = flat_out[:total]
    return jnp.reshape(flat_out, out_shape)  # free metadata reshape back


if __name__ == "__main__":
    key = jax.random.PRNGKey(0)
    k1, k2, k3 = jax.random.split(key, 3)

    # 1) Standard NCHW case: (2, 4, 16, 16), combine C,H -> (2, 64, 16).
    x1 = jax.random.normal(k1, (2, 4, 16, 16), dtype=jnp.float32)
    o1 = jax.block_until_ready(combine_dim(x1, dim=1, num_dims=2))
    r1 = jnp.reshape(x1, (2, -1, 16))
    assert o1.shape == r1.shape and o1.dtype == r1.dtype
    assert bool(jnp.array_equal(o1, r1))

    # 2) Awkward flat size (945 elems, not a multiple of 128): exercises the
    #    pad-to-lane-dense fallback path.
    x2 = jax.random.normal(k2, (3, 5, 7, 9), dtype=jnp.float32)
    o2 = jax.block_until_ready(combine_dim(x2, dim=1, num_dims=2))
    r2 = jnp.reshape(x2, (3, -1, 9))
    assert o2.shape == r2.shape and bool(jnp.array_equal(o2, r2))

    # 3) Negative dim + multi-step grid with a ragged last block.
    x3 = jax.random.normal(k3, (5, 8, 16, 128), dtype=jnp.float32)
    o3 = jax.block_until_ready(combine_dim(x3, dim=-3, num_dims=2))
    r3 = jnp.reshape(x3, (5, -1, 128))
    assert o3.shape == r3.shape and bool(jnp.array_equal(o3, r3))

    print("KERNEL_OK")
</pallas_src>

<mosaic_0001>
module attributes {stable_mosaic.version = 11 : i64} {
  func.func @_copy_kernel(%arg0: i32, %arg1: memref<8x256xf32, #tpu.memory_space<vmem>>, %arg2: memref<8x256xf32, #tpu.memory_space<vmem>>) attributes {dimension_semantics = [#tpu.dimension_semantics<parallel>], iteration_bounds = array<i64: 1>, scalar_prefetch = 0 : i64, scratch_operands = 0 : i64, tpu.core_type = #tpu.core_type<tc>, window_params = [{transform_indices = @transform_0, window_bounds = array<i64: 8, 256>}, {transform_indices = @transform_1, window_bounds = array<i64: 8, 256>}]} {
    %c0 = arith.constant 0 : index
    %c0_0 = arith.constant 0 : index
    %0 = vector.load %arg1[%c0, %c0_0] : memref<8x256xf32, #tpu.memory_space<vmem>>, vector<8x256xf32>
    %c0_1 = arith.constant 0 : index
    %c0_2 = arith.constant 0 : index
    %1 = vector.load %arg2[%c0_1, %c0_2] : memref<8x256xf32, #tpu.memory_space<vmem>>, vector<8x256xf32>
    tpu.vector_store %arg2[%c0_1, %c0_2], %0 {strides = array<i32>} : memref<8x256xf32, #tpu.memory_space<vmem>>, vector<8x256xf32>,
    return
  }
  func.func @transform_0(%arg0: i32) -> (i32, i32) {
    %c0_i32 = arith.constant 0 : i32
    %c0_i32_0 = arith.constant 0 : i32
    return %arg0, %c0_i32 : i32, i32
  }
  func.func @transform_1(%arg0: i32) -> (i32, i32) {
    %c0_i32 = arith.constant 0 : i32
    %c0_i32_0 = arith.constant 0 : i32
    return %arg0, %c0_i32 : i32, i32
  }
}

</mosaic_0001>

<llo_original>
// kernel: tpu_custom_call.1
$region0: #{tpu_custom_call.1}
  #allocation0 [shape = 'u32[]', space=smem, size = 0x4, offset = 0x4, fixed_abs, tag = 'smem constant byte address 0x4 - core index']
  #allocation1 [shape = 'u32[144,128]{1,0:T(1,128)}', space=vmem, size = 0x12000, scoped, tag = 'internal scratch']
  %s0 = inlined_call_operand.hbm [shape: f32[8,256], index: 0, kind: input, shape index: {}]
  %s1 = inlined_call_operand.hbm [shape: f32[8,256], index: 1, kind: output, shape index: {}]
  %s2 = sld [smem:[#allocation0]]
  $region18: #{tpu_custom_call.1} parent=0
    _
  %s4 = ssub.s32 1, %s2
  %s5 = scalar_select 0, %s4, %s2
  $region1: #{tpu_custom_call.1} parent=0
    #allocation2 [shape = 'u8[8192]{0}', space=vmem, size = 0x2000, scoped, tag = 'input window, operand 0, single buffered']
    #allocation3 [shape = 's32[1]{0}', space=sflag, size = 0x4, scoped, tag = 'scoped memory for tpu_custom_call.1']
    #allocation4 [shape = 's32[1]{0}', space=sflag, size = 0x4, scoped, tag = 'scoped memory for tpu_custom_call.1']
    #allocation5 [shape = 'u8[8192]{0}', space=vmem, size = 0x2000, scoped, tag = 'output window, operand 0, single buffered']
    %6 = vsyncpa [#allocation3], 0
    %7 = vsyncpa [#allocation4], 0
    // Predicated region
    $region2: #{tpu_custom_call.1} parent=1 // pred_check
      _
    $region3: #{tpu_custom_call.1} parent=1 // pred_check_branch
      %9 = sbr.rel (0) target = $region5
    $region4: #{tpu_custom_call.1} parent=1 // pred_region
      %s11 = ssub.s32 256, 256
      %12 = vsyncadd [#allocation3], %s11
      %s14 = sshll.u32 [#allocation2], 4
      %s15 = int_to_ptr.vmem [resolvable:$true] %s14
      %17 = dma.hbm_to_vmem [thread:$0]  %s0, 256, %s15, [#allocation3]
    $region5: #{tpu_custom_call.1} parent=1 // pred_fallthru
      _
    // Predicated region
    $region6: #{tpu_custom_call.1} parent=1 // pred_check
      _
    $region7: #{tpu_custom_call.1} parent=1 // pred_check_branch
      %19 = sbr.rel (0) target = $region9
    $region8: #{tpu_custom_call.1} parent=1 // pred_region
      %20 = dma.done [#allocation3], 256
    $region9: #{tpu_custom_call.1} parent=1 // pred_fallthru
      _
    %v21 = vld [vmem:[#allocation2] sm:$0xff]
    %v22 = vld [vmem:[#allocation2 + $0x8] sm:$0xff]
    %23 = vst [vmem:[#allocation5] sm:$0xff] %v21
    %24 = vst [vmem:[#allocation5 + $0x8] sm:$0xff] %v22
    // Predicated region
    $region10: #{tpu_custom_call.1} parent=1 // pred_check
      _
    $region11: #{tpu_custom_call.1} parent=1 // pred_check_branch
      %26 = sbr.rel (0) target = $region13
    $region12: #{tpu_custom_call.1} parent=1 // pred_region
      %s28 = ssub.s32 256, 256
      %29 = vsyncadd [#allocation4], %s28
      %s31 = sshll.u32 [#allocation5], 4
      %s32 = int_to_ptr.vmem [resolvable:$true] %s31
      %34 = dma.vmem_to_hbm [thread:$0]  %s32, 256, %s1, [#allocation4]
    $region13: #{tpu_custom_call.1} parent=1 // pred_fallthru
      _
    // Predicated region
    $region14: #{tpu_custom_call.1} parent=1 // pred_check
      _
    $region15: #{tpu_custom_call.1} parent=1 // pred_check_branch
      %36 = sbr.rel (0) target = $region17
    $region16: #{tpu_custom_call.1} parent=1 // pred_region
      %37 = dma.done [#allocation4], 256
    $region17: #{tpu_custom_call.1} parent=1 // pred_fallthru
      _
    %38 = vsyncpa [#allocation3], 1
    %39 = vsyncpa [#allocation4], 1

</llo_original>
